<compile_context>
chip_gen: v7x
topology: tpu7x:2x2x1
jax: 0.10.0
libtpu: 0.0.40
codegen_flags: <defaults>
</compile_context>

<pallas_src>
import functools

import jax
import jax.numpy as jnp
from jax import lax
from jax.experimental import pallas as pl
from jax.experimental.pallas import tpu as pltpu

EMB_DIM = 256
H1 = 512
H2 = 256
OUT_DIM = 128
LN_EPS = 1e-5


# ---------------------------------------------------------------------------
# kernels
# ---------------------------------------------------------------------------
def _mlp_layernorm(xm, w1_ref, b1_ref, w2_ref, b2_ref, w3_ref, b3_ref,
                   gamma_ref, beta_ref, o_ref):
    """xm: (TB, EMB_DIM) f32.  bf16 MXU operands, f32 accumulation; bias adds,
    ReLU and LayerNorm stay in f32 on the VPU/EUP."""
    h1 = jnp.dot(xm.astype(jnp.bfloat16), w1_ref[...],
                 preferred_element_type=jnp.float32)
    h1 = jnp.maximum(h1 + b1_ref[...], 0.0)                        # (TB, 512)

    h2 = jnp.dot(h1.astype(jnp.bfloat16), w2_ref[...],
                 preferred_element_type=jnp.float32)
    h2 = jnp.maximum(h2 + b2_ref[...], 0.0)                        # (TB, 256)

    h3 = jnp.dot(h2.astype(jnp.bfloat16), w3_ref[...],
                 preferred_element_type=jnp.float32)
    h3 = h3 + b3_ref[...]                                          # (TB, 128)

    mu = jnp.mean(h3, axis=-1, keepdims=True)
    var = jnp.mean((h3 - mu) * (h3 - mu), axis=-1, keepdims=True)
    y = (h3 - mu) * lax.rsqrt(var + LN_EPS)
    o_ref[...] = (y * gamma_ref[...] + beta_ref[...]).astype(o_ref.dtype)


def _encoder2d_kernel(x_ref, w1_ref, b1_ref, w2_ref, b2_ref, w3_ref, b3_ref,
                      gamma_ref, beta_ref, o_ref):
    # 2-D input path: no sequence axis at all (dense sublane packing, no mean).
    _mlp_layernorm(x_ref[...].astype(jnp.float32),
                   w1_ref, b1_ref, w2_ref, b2_ref, w3_ref, b3_ref,
                   gamma_ref, beta_ref, o_ref)


def _encoder3d_kernel(x_ref, w1_ref, b1_ref, w2_ref, b2_ref, w3_ref, b3_ref,
                      gamma_ref, beta_ref, o_ref, acc_ref, *,
                      seq_len, s_chunk, mask_seq):
    # grid = (batch tiles [parallel], seq chunks [arbitrary]).
    s = pl.program_id(1)

    @pl.when(s == 0)
    def _():
        acc_ref[...] = jnp.zeros_like(acc_ref)

    xblk = x_ref[...]                                   # (TB, s_chunk, E)
    if mask_seq:
        # Last seq chunk extends past seq_len -> zero the padded rows.
        row = lax.broadcasted_iota(jnp.int32, (s_chunk, EMB_DIM), 0)
        valid = seq_len - s * s_chunk
        xblk = jnp.where((row < valid)[None, :, :], xblk, 0.0)

    # f32-accumulating sequence sum; no materialized f32 copy of the x tile.
    acc_ref[...] += jnp.sum(xblk, axis=1, dtype=jnp.float32)

    @pl.when(s == pl.num_programs(1) - 1)
    def _():
        xm = acc_ref[...] * jnp.float32(1.0 / seq_len)  # mean over S, in f32
        _mlp_layernorm(xm, w1_ref, b1_ref, w2_ref, b2_ref, w3_ref, b3_ref,
                       gamma_ref, beta_ref, o_ref)


# ---------------------------------------------------------------------------
# tiling plan (generation-aware)
# ---------------------------------------------------------------------------
def _round_dn8(n):
    return (n // 8) * 8


def _round_up8(n):
    return ((n + 7) // 8) * 8


def _vmem_capacity_bytes():
    try:
        info = pltpu.get_tpu_info()
        for name in ("vmem_capacity_bytes", "vmem_size_bytes", "vmem_bytes"):
            v = getattr(info, name, None)
            if v:
                return int(v)
    except Exception:
        pass
    return 64 * 1024 * 1024           # conservative: v7x per-TensorCore VMEM


def _plan(batch, seq, x_itemsize, max_block_bytes=None):
    """Returns (tb, n_b, s_chunk, n_s, vmem_limit_bytes)."""
    vmem = _vmem_capacity_bytes()
    small_vmem = vmem < 100 * 1024 * 1024          # v7x: 64 MiB per TC
    if max_block_bytes is None:
        # per-buffer budget for the (double-buffered) x block
        max_block_bytes = (8 if small_vmem else 24) * 1024 * 1024
    vmem_limit = min(vmem * 3 // 4, 96 * 1024 * 1024)
    tb_cap = 1024 if small_vmem else 2048

    seq = max(int(seq), 1)
    s_min = seq if seq <= 8 else 8                 # smallest legal seq chunk

    # ---- batch tile (multiple of 8, or the full batch) ----
    if batch <= 8:
        tb = batch
    else:
        row_bytes = s_min * EMB_DIM * x_itemsize
        tb = min(tb_cap, max(8, _round_dn8(max_block_bytes // row_bytes)))
        if small_vmem and batch >= 16:
            # v7x: guarantee >=2 batch tiles so the "parallel" axis can shard
            # across both TensorCores.
            tb = min(tb, _round_up8((batch + 1) // 2))
        if tb >= batch:
            tb = batch
        else:
            for cand in range(tb, 7, -8):          # prefer tb that divides B
                if batch % cand == 0:
                    tb = cand
                    break
    n_b = pl.cdiv(batch, tb)

    # ---- sequence chunk (multiple of 8, or the full sequence) ----
    if seq <= 8 or tb * seq * EMB_DIM * x_itemsize <= max_block_bytes:
        s_chunk = seq
    else:
        cap = max(8, _round_dn8(max_block_bytes // (tb * EMB_DIM * x_itemsize)))
        cap = min(cap, _round_dn8(seq))
        s_chunk = cap
        for cand in range(cap, 7, -8):             # prefer s_chunk | seq
            if seq % cand == 0:
                s_chunk = cand
                break
    n_s = pl.cdiv(seq, s_chunk)
    return tb, n_b, s_chunk, n_s, vmem_limit


# ---------------------------------------------------------------------------
# wrapper
# ---------------------------------------------------------------------------
def embedding_encoder(x, params, *, max_block_bytes=None):
    """x: (B, EMB_DIM) or (B, S, EMB_DIM), any float dtype.
    Returns (B, OUT_DIM) float32 (PyTorch forward semantics)."""
    w1, b1, w2, b2, w3, b3, gamma, beta = params
    # Weights -> bf16 once (~0.6 MiB, VMEM-resident across grid steps).
    # x keeps its native dtype: no extra HBM cast pass over the big stream.
    w1, w2, w3 = (w.astype(jnp.bfloat16) for w in (w1, w2, w3))

    if x.ndim == 2:
        B, E = x.shape
        S = 1
    elif x.ndim == 3:
        B, S, E = x.shape
    else:
        raise ValueError(f"expected 2-D or 3-D input, got shape {x.shape}")
    assert E == EMB_DIM, x.shape

    tb, n_b, s_chunk, n_s, vmem_limit = _plan(B, S, x.dtype.itemsize,
                                              max_block_bytes)

    if x.ndim == 2:
        grid = (n_b,)
        x_spec = pl.BlockSpec((tb, EMB_DIM), lambda i: (i, 0))
        o_spec = pl.BlockSpec((tb, OUT_DIM), lambda i: (i, 0))
        const = lambda shape: pl.BlockSpec(shape, lambda i: (0,) * len(shape))
        kernel = _encoder2d_kernel
        scratch = []
        semantics = ("parallel",)
    else:
        grid = (n_b, n_s)
        x_spec = pl.BlockSpec((tb, s_chunk, EMB_DIM), lambda i, s: (i, s, 0))
        o_spec = pl.BlockSpec((tb, OUT_DIM), lambda i, s: (i, 0))
        const = lambda shape: pl.BlockSpec(shape,
                                           lambda i, s: (0,) * len(shape))
        kernel = functools.partial(_encoder3d_kernel, seq_len=S,
                                   s_chunk=s_chunk,
                                   mask_seq=(S % s_chunk != 0))
        scratch = [pltpu.VMEM((tb, EMB_DIM), jnp.float32)]
        semantics = ("parallel", "arbitrary")

    flops = 2 * B * (EMB_DIM * H1 + H1 * H2 + H2 * OUT_DIM)
    bytes_accessed = (x.size * x.dtype.itemsize
                      + (w1.size + w2.size + w3.size) * 2
                      + (b1.size + b2.size + b3.size + gamma.size
                         + beta.size) * 4
                      + B * OUT_DIM * 4)

    return pl.pallas_call(
        kernel,
        out_shape=jax.ShapeDtypeStruct((B, OUT_DIM), jnp.float32),
        grid=grid,
        in_specs=[
            x_spec,
            const((EMB_DIM, H1)), const((1, H1)),
            const((H1, H2)), const((1, H2)),
            const((H2, OUT_DIM)), const((1, OUT_DIM)),
            const((1, OUT_DIM)), const((1, OUT_DIM)),
        ],
        out_specs=o_spec,
        scratch_shapes=scratch,
        compiler_params=pltpu.CompilerParams(
            dimension_semantics=semantics,
            vmem_limit_bytes=vmem_limit),
        cost_estimate=pl.CostEstimate(
            flops=flops, transcendentals=B, bytes_accessed=bytes_accessed),
    )(x, w1, b1, w2, b2, w3, b3, gamma, beta)


# ---------------------------------------------------------------------------
# deterministic params + pure-JAX reference
# ---------------------------------------------------------------------------
def init_params(key):
    """PyTorch-Linear-style uniform init (deterministic)."""
    ks = jax.random.split(key, 6)

    def linear(kw, kb, fan_in, fan_out):
        bound = 1.0 / (fan_in ** 0.5)
        w = jax.random.uniform(kw, (fan_in, fan_out), jnp.float32, -bound, bound)
        b = jax.random.uniform(kb, (1, fan_out), jnp.float32, -bound, bound)
        return w, b

    w1, b1 = linear(ks[0], ks[1], EMB_DIM, H1)
    w2, b2 = linear(ks[2], ks[3], H1, H2)
    w3, b3 = linear(ks[4], ks[5], H2, OUT_DIM)
    gamma = jnp.ones((1, OUT_DIM), jnp.float32)    # LayerNorm weight init = 1
    beta = jnp.zeros((1, OUT_DIM), jnp.float32)    # LayerNorm bias init = 0
    return (w1, b1, w2, b2, w3, b3, gamma, beta)


def _reference(x, params, matmul_dtype=jnp.float32):
    """Pure-JAX reference.  The seq-mean is always f32 (like the kernel);
    matmul_dtype=bf16 mimics the kernel's MXU operand casts."""
    w1, b1, w2, b2, w3, b3, gamma, beta = params
    x = x.astype(jnp.float32)
    if x.ndim == 3:
        x = jnp.mean(x, axis=1)

    def dense(h, w, b):
        return jnp.dot(h.astype(matmul_dtype), w.astype(matmul_dtype),
                       preferred_element_type=jnp.float32) + b

    h = jnp.maximum(dense(x, w1, b1), 0.0)
    h = jnp.maximum(dense(h, w2, b2), 0.0)
    h = dense(h, w3, b3)
    mu = jnp.mean(h, axis=-1, keepdims=True)
    var = jnp.mean((h - mu) ** 2, axis=-1, keepdims=True)
    return (h - mu) * lax.rsqrt(var + LN_EPS) * gamma + beta


if __name__ == "__main__":
    key = jax.random.PRNGKey(0)
    k_param, k_x3, k_x2, k_xl = jax.random.split(key, 4)

    params = init_params(k_param)

    # 3-D input path: (batch=2, seq=8, embedding_dim=256)
    x3 = jax.random.normal(k_x3, (2, 8, EMB_DIM), jnp.float32)
    y3 = jax.block_until_ready(embedding_encoder(x3, params))

    # 2-D input path: (batch=2, embedding_dim=256)
    x2 = jax.random.normal(k_x2, (2, EMB_DIM), jnp.float32)
    y2 = jax.block_until_ready(embedding_encoder(x2, params))

    assert y3.shape == (2, OUT_DIM) and y2.shape == (2, OUT_DIM)

    # Exercise the multi-tile / seq-chunk / masked-edge paths with a tiny
    # forced block budget (grid (3,3): padded last batch tile + masked chunk).
    xl = jax.random.normal(k_xl, (20, 20, EMB_DIM), jnp.float32)
    yl = jax.block_until_ready(
        embedding_encoder(xl, params, max_block_bytes=96 * 1024))
    assert yl.shape == (20, OUT_DIM)

    # Matched (bf16-MXU, f32-accumulate) reference: tight agreement expected.
    for y, x in ((y3, x3), (y2, x2), (yl, xl)):
        rb = _reference(x, params, jnp.bfloat16)
        assert jnp.allclose(y, rb, atol=2e-2, rtol=2e-2), (
            float(jnp.max(jnp.abs(y - rb))))

    # Full-f32 reference (PyTorch semantics): bf16 MXU operands give ~1e-2
    # level deviations after LayerNorm, hence the loosened tolerance.
    for y, x in ((y3, x3), (y2, x2), (yl, xl)):
        rf = _reference(x, params, jnp.float32)
        assert jnp.allclose(y, rf, atol=1e-1, rtol=1e-1), (
            float(jnp.max(jnp.abs(y - rf))))

    print("KERNEL_OK")
</pallas_src>

<mosaic_0001>
module attributes {stable_mosaic.version = 11 : i64} {
  func.func @_encoder3d_kernel(%arg0: i32, %arg1: i32, %arg2: memref<2x8x256xf32, #tpu.memory_space<vmem>>, %arg3: memref<256x512xbf16, #tpu.memory_space<vmem>>, %arg4: memref<1x512xf32, #tpu.memory_space<vmem>>, %arg5: memref<512x256xbf16, #tpu.memory_space<vmem>>, %arg6: memref<1x256xf32, #tpu.memory_space<vmem>>, %arg7: memref<256x128xbf16, #tpu.memory_space<vmem>>, %arg8: memref<1x128xf32, #tpu.memory_space<vmem>>, %arg9: memref<1x128xf32, #tpu.memory_space<vmem>>, %arg10: memref<1x128xf32, #tpu.memory_space<vmem>>, %arg11: memref<2x128xf32, #tpu.memory_space<vmem>>, %arg12: memref<2x256xf32, #tpu.memory_space<vmem>>) attributes {dimension_semantics = [#tpu.dimension_semantics<parallel>, #tpu.dimension_semantics<arbitrary>], iteration_bounds = array<i64: 1, 1>, scalar_prefetch = 0 : i64, scratch_operands = 1 : i64, tpu.core_type = #tpu.core_type<tc>, window_params = [{transform_indices = @transform_0, window_bounds = array<i64: 2, 8, 256>}, {pipeline_mode = #tpu.pipeline_mode<synchronous>, transform_indices = @transform_1, window_bounds = array<i64: 256, 512>}, {pipeline_mode = #tpu.pipeline_mode<synchronous>, transform_indices = @transform_2, window_bounds = array<i64: 1, 512>}, {pipeline_mode = #tpu.pipeline_mode<synchronous>, transform_indices = @transform_3, window_bounds = array<i64: 512, 256>}, {pipeline_mode = #tpu.pipeline_mode<synchronous>, transform_indices = @transform_4, window_bounds = array<i64: 1, 256>}, {pipeline_mode = #tpu.pipeline_mode<synchronous>, transform_indices = @transform_5, window_bounds = array<i64: 256, 128>}, {pipeline_mode = #tpu.pipeline_mode<synchronous>, transform_indices = @transform_6, window_bounds = array<i64: 1, 128>}, {pipeline_mode = #tpu.pipeline_mode<synchronous>, transform_indices = @transform_7, window_bounds = array<i64: 1, 128>}, {pipeline_mode = #tpu.pipeline_mode<synchronous>, transform_indices = @transform_8, window_bounds = array<i64: 1, 128>}, {transform_indices = @transform_9, window_bounds = array<i64: 2, 128>}]} {
    %c0_i32 = arith.constant 0 : i32
    %0 = arith.cmpi eq, %arg1, %c0_i32 : i32
    %1 = arith.extui %0 : i1 to i32
    %c0_i32_0 = arith.constant 0 : i32
    %2 = arith.cmpi ne, %1, %c0_i32_0 : i32
    scf.if %2 {
      %cst_9 = arith.constant 0.000000e+00 : f32
      %11 = vector.broadcast %cst_9 : f32 to vector<2x256xf32>
      %c0_10 = arith.constant 0 : index
      %c0_11 = arith.constant 0 : index
      %12 = vector.load %arg12[%c0_10, %c0_11] : memref<2x256xf32, #tpu.memory_space<vmem>>, vector<2x256xf32>
      tpu.vector_store %arg12[%c0_10, %c0_11], %11 {strides = array<i32>} : memref<2x256xf32, #tpu.memory_space<vmem>>, vector<2x256xf32>,
    } else {
    }
    %c0 = arith.constant 0 : index
    %c0_1 = arith.constant 0 : index
    %c0_2 = arith.constant 0 : index
    %3 = vector.load %arg2[%c0, %c0_1, %c0_2] : memref<2x8x256xf32, #tpu.memory_space<vmem>>, vector<2x8x256xf32>
    %c0_3 = arith.constant 0 : index
    %c0_4 = arith.constant 0 : index
    %4 = vector.load %arg12[%c0_3, %c0_4] : memref<2x256xf32, #tpu.memory_space<vmem>>, vector<2x256xf32>
    %cst = arith.constant dense<0.000000e+00> : vector<2x256xf32>
    %5 = vector.multi_reduction <add>, %3, %cst [1] : vector<2x8x256xf32> to vector<2x256xf32>
    %6 = arith.addf %4, %5 : vector<2x256xf32>
    %c0_5 = arith.constant 0 : index
    %c0_6 = arith.constant 0 : index
    %7 = vector.load %arg12[%c0_5, %c0_6] : memref<2x256xf32, #tpu.memory_space<vmem>>, vector<2x256xf32>
    tpu.vector_store %arg12[%c0_5, %c0_6], %6 {strides = array<i32>} : memref<2x256xf32, #tpu.memory_space<vmem>>, vector<2x256xf32>,
    %c0_i32_7 = arith.constant 0 : i32
    %8 = arith.cmpi eq, %arg1, %c0_i32_7 : i32
    %9 = arith.extui %8 : i1 to i32
    %c0_i32_8 = arith.constant 0 : i32
    %10 = arith.cmpi ne, %9, %c0_i32_8 : i32
    scf.if %10 {
      %c0_9 = arith.constant 0 : index
      %c0_10 = arith.constant 0 : index
      %11 = vector.load %arg12[%c0_9, %c0_10] : memref<2x256xf32, #tpu.memory_space<vmem>>, vector<2x256xf32>
      %cst_11 = arith.constant 1.250000e-01 : f32
      %12 = vector.broadcast %cst_11 : f32 to vector<2x256xf32>
      %13 = arith.mulf %11, %12 : vector<2x256xf32>
      %14 = arith.truncf %13 : vector<2x256xf32> to vector<2x256xbf16>
      %c0_12 = arith.constant 0 : index
      %c0_13 = arith.constant 0 : index
      %15 = vector.load %arg3[%c0_12, %c0_13] : memref<256x512xbf16, #tpu.memory_space<vmem>>, vector<256x512xbf16>
      %cst_14 = arith.constant dense<0.000000e+00> : vector<2x512xf32>
      %16 = tpu.matmul %14, %15, %cst_14 {dimension_numbers = #tpu.dot_dimension_numbers<[1], [0], [0], [1], [0, 0, 1, 1], [], []>} : vector<2x256xbf16>, vector<256x512xbf16>, vector<2x512xf32> -> vector<2x512xf32>
      %c0_15 = arith.constant 0 : index
      %c0_16 = arith.constant 0 : index
      %17 = vector.load %arg4[%c0_15, %c0_16] : memref<1x512xf32, #tpu.memory_space<vmem>>, vector<1x512xf32>
      %18 = vector.broadcast %17 : vector<1x512xf32> to vector<2x512xf32>
      %19 = arith.addf %16, %18 : vector<2x512xf32>
      %cst_17 = arith.constant 0.000000e+00 : f32
      %20 = vector.broadcast %cst_17 : f32 to vector<2x512xf32>
      %21 = arith.maximumf %19, %20 : vector<2x512xf32>
      %22 = arith.truncf %21 : vector<2x512xf32> to vector<2x512xbf16>
      %c0_18 = arith.constant 0 : index
      %c0_19 = arith.constant 0 : index
      %23 = vector.load %arg5[%c0_18, %c0_19] : memref<512x256xbf16, #tpu.memory_space<vmem>>, vector<512x256xbf16>
      %cst_20 = arith.constant dense<0.000000e+00> : vector<2x256xf32>
      %24 = tpu.matmul %22, %23, %cst_20 {dimension_numbers = #tpu.dot_dimension_numbers<[1], [0], [0], [1], [0, 0, 1, 1], [], []>} : vector<2x512xbf16>, vector<512x256xbf16>, vector<2x256xf32> -> vector<2x256xf32>
      %c0_21 = arith.constant 0 : index
      %c0_22 = arith.constant 0 : index
      %25 = vector.load %arg6[%c0_21, %c0_22] : memref<1x256xf32, #tpu.memory_space<vmem>>, vector<1x256xf32>
      %26 = vector.broadcast %25 : vector<1x256xf32> to vector<2x256xf32>
      %27 = arith.addf %24, %26 : vector<2x256xf32>
      %cst_23 = arith.constant 0.000000e+00 : f32
      %28 = vector.broadcast %cst_23 : f32 to vector<2x256xf32>
      %29 = arith.maximumf %27, %28 : vector<2x256xf32>
      %30 = arith.truncf %29 : vector<2x256xf32> to vector<2x256xbf16>
      %c0_24 = arith.constant 0 : index
      %c0_25 = arith.constant 0 : index
      %31 = vector.load %arg7[%c0_24, %c0_25] : memref<256x128xbf16, #tpu.memory_space<vmem>>, vector<256x128xbf16>
      %cst_26 = arith.constant dense<0.000000e+00> : vector<2x128xf32>
      %32 = tpu.matmul %30, %31, %cst_26 {dimension_numbers = #tpu.dot_dimension_numbers<[1], [0], [0], [1], [0, 0, 1, 1], [], []>} : vector<2x256xbf16>, vector<256x128xbf16>, vector<2x128xf32> -> vector<2x128xf32>
      %c0_27 = arith.constant 0 : index
      %c0_28 = arith.constant 0 : index
      %33 = vector.load %arg8[%c0_27, %c0_28] : memref<1x128xf32, #tpu.memory_space<vmem>>, vector<1x128xf32>
      %34 = vector.broadcast %33 : vector<1x128xf32> to vector<2x128xf32>
      %35 = arith.addf %32, %34 : vector<2x128xf32>
      %cst_29 = arith.constant dense<0.000000e+00> : vector<2xf32>
      %36 = vector.multi_reduction <add>, %35, %cst_29 [1] : vector<2x128xf32> to vector<2xf32>
      %37 = vector.shape_cast %36 : vector<2xf32> to vector<2x1xf32>
      %cst_30 = arith.constant 1.280000e+02 : f32
      %38 = vector.broadcast %cst_30 : f32 to vector<2x1xf32>
      %39 = arith.divf %37, %38 : vector<2x1xf32>
      %40 = vector.broadcast %39 : vector<2x1xf32> to vector<2x128xf32>
      %41 = arith.subf %35, %40 : vector<2x128xf32>
      %42 = vector.broadcast %39 : vector<2x1xf32> to vector<2x128xf32>
      %43 = arith.subf %35, %42 : vector<2x128xf32>
      %44 = arith.mulf %41, %43 : vector<2x128xf32>
      %cst_31 = arith.constant dense<0.000000e+00> : vector<2xf32>
      %45 = vector.multi_reduction <add>, %44, %cst_31 [1] : vector<2x128xf32> to vector<2xf32>
      %46 = vector.shape_cast %45 : vector<2xf32> to vector<2x1xf32>
      %cst_32 = arith.constant 1.280000e+02 : f32
      %47 = vector.broadcast %cst_32 : f32 to vector<2x1xf32>
      %48 = arith.divf %46, %47 : vector<2x1xf32>
      %49 = vector.broadcast %39 : vector<2x1xf32> to vector<2x128xf32>
      %50 = arith.subf %35, %49 : vector<2x128xf32>
      %cst_33 = arith.constant 9.99999974E-6 : f32
      %51 = vector.broadcast %cst_33 : f32 to vector<2x1xf32>
      %52 = arith.addf %48, %51 : vector<2x1xf32>
      %53 = math.rsqrt %52 : vector<2x1xf32>
      %54 = vector.broadcast %53 : vector<2x1xf32> to vector<2x128xf32>
      %55 = arith.mulf %50, %54 : vector<2x128xf32>
      %c0_34 = arith.constant 0 : index
      %c0_35 = arith.constant 0 : index
      %56 = vector.load %arg9[%c0_34, %c0_35] : memref<1x128xf32, #tpu.memory_space<vmem>>, vector<1x128xf32>
      %57 = vector.broadcast %56 : vector<1x128xf32> to vector<2x128xf32>
      %58 = arith.mulf %55, %57 : vector<2x128xf32>
      %c0_36 = arith.constant 0 : index
      %c0_37 = arith.constant 0 : index
      %59 = vector.load %arg10[%c0_36, %c0_37] : memref<1x128xf32, #tpu.memory_space<vmem>>, vector<1x128xf32>
      %60 = vector.broadcast %59 : vector<1x128xf32> to vector<2x128xf32>
      %61 = arith.addf %58, %60 : vector<2x128xf32>
      %c0_38 = arith.constant 0 : index
      %c0_39 = arith.constant 0 : index
      %62 = vector.load %arg11[%c0_38, %c0_39] : memref<2x128xf32, #tpu.memory_space<vmem>>, vector<2x128xf32>
      tpu.vector_store %arg11[%c0_38, %c0_39], %61 {strides = array<i32>} : memref<2x128xf32, #tpu.memory_space<vmem>>, vector<2x128xf32>,
    } else {
    }
    return
  }
  func.func @transform_0(%arg0: i32, %arg1: i32) -> (i32, i32, i32) {
    %c0_i32 = arith.constant 0 : i32
    %c0_i32_0 = arith.constant 0 : i32
    return %arg0, %arg1, %c0_i32 : i32, i32, i32
  }
  func.func @transform_1(%arg0: i32, %arg1: i32) -> (i32, i32) {
    %c0_i32 = arith.constant 0 : i32
    %c0_i32_0 = arith.constant 0 : i32
    %c0_i32_1 = arith.constant 0 : i32
    return %c0_i32, %c0_i32_0 : i32, i32
  }
  func.func @transform_2(%arg0: i32, %arg1: i32) -> (i32, i32) {
    %c0_i32 = arith.constant 0 : i32
    %c0_i32_0 = arith.constant 0 : i32
    %c0_i32_1 = arith.constant 0 : i32
    return %c0_i32, %c0_i32_0 : i32, i32
  }
  func.func @transform_3(%arg0: i32, %arg1: i32) -> (i32, i32) {
    %c0_i32 = arith.constant 0 : i32
    %c0_i32_0 = arith.constant 0 : i32
    %c0_i32_1 = arith.constant 0 : i32
    return %c0_i32, %c0_i32_0 : i32, i32
  }
  func.func @transform_4(%arg0: i32, %arg1: i32) -> (i32, i32) {
    %c0_i32 = arith.constant 0 : i32
    %c0_i32_0 = arith.constant 0 : i32
    %c0_i32_1 = arith.constant 0 : i32
    return %c0_i32, %c0_i32_0 : i32, i32
  }
  func.func @transform_5(%arg0: i32, %arg1: i32) -> (i32, i32) {
    %c0_i32 = arith.constant 0 : i32
    %c0_i32_0 = arith.constant 0 : i32
    %c0_i32_1 = arith.constant 0 : i32
    return %c0_i32, %c0_i32_0 : i32, i32
  }
  func.func @transform_6(%arg0: i32, %arg1: i32) -> (i32, i32) {
    %c0_i32 = arith.constant 0 : i32
    %c0_i32_0 = arith.constant 0 : i32
    %c0_i32_1 = arith.constant 0 : i32
    return %c0_i32, %c0_i32_0 : i32, i32
  }
  func.func @transform_7(%arg0: i32, %arg1: i32) -> (i32, i32) {
    %c0_i32 = arith.constant 0 : i32
    %c0_i32_0 = arith.constant 0 : i32
    %c0_i32_1 = arith.constant 0 : i32
    return %c0_i32, %c0_i32_0 : i32, i32
  }
  func.func @transform_8(%arg0: i32, %arg1: i32) -> (i32, i32) {
    %c0_i32 = arith.constant 0 : i32
    %c0_i32_0 = arith.constant 0 : i32
    %c0_i32_1 = arith.constant 0 : i32
    return %c0_i32, %c0_i32_0 : i32, i32
  }
  func.func @transform_9(%arg0: i32, %arg1: i32) -> (i32, i32) {
    %c0_i32 = arith.constant 0 : i32
    %c0_i32_0 = arith.constant 0 : i32
    return %arg0, %c0_i32 : i32, i32
  }
}

</mosaic_0001>

<llo_original>
// kernel: tpu_custom_call.1
$region0: #{tpu_custom_call.1}
  #allocation0 [shape = 'u32[]', space=smem, size = 0x4, offset = 0x4, fixed_abs, tag = 'smem constant byte address 0x4 - core index']
  #allocation1 [shape = 'u32[144,128]{1,0:T(1,128)}', space=vmem, size = 0x12000, scoped, tag = 'internal scratch']
  #allocation2 [shape = 'f32[2,256]{1,0:T(2,128)}', space=vmem, size = 0x800, scoped, tag = 'scratch operand']
  %s0 = inlined_call_operand.hbm [shape: f32[2,8,256], index: 0, kind: input, shape index: {}]
  %s1 = inlined_call_operand.hbm [shape: bf16[256,512], index: 1, kind: input, shape index: {}]
  %s2 = inlined_call_operand.vmem [shape: f32[1,512], index: 2, kind: input, shape index: {}]
  %s3 = inlined_call_operand.hbm [shape: bf16[512,256], index: 3, kind: input, shape index: {}]
  %s4 = inlined_call_operand.vmem [shape: f32[1,256], index: 4, kind: input, shape index: {}]
  %s5 = inlined_call_operand.hbm [shape: bf16[256,128], index: 5, kind: input, shape index: {}]
  %s6 = inlined_call_operand.vmem [shape: f32[1,128], index: 6, kind: input, shape index: {}]
  %s7 = inlined_call_operand.vmem [shape: f32[1,128], index: 7, kind: input, shape index: {}]
  %s8 = inlined_call_operand.vmem [shape: f32[1,128], index: 8, kind: input, shape index: {}]
  %s9 = inlined_call_operand.hbm [shape: f32[2,128], index: 9, kind: output, shape index: {}]
  %s10 = sld [smem:[#allocation0]]
  $region70: #{tpu_custom_call.1} parent=0
    _
  %s12 = ssub.s32 1, %s10
  %s13 = scalar_select 0, %s12, %s10
  $region1: #{tpu_custom_call.1} parent=0
    #allocation3 [shape = 'u8[16384]{0}', space=vmem, size = 0x4000, scoped, tag = 'input window, operand 0, single buffered']
    #allocation4 [shape = 's32[1]{0}', space=sflag, size = 0x4, scoped, tag = 'scoped memory for tpu_custom_call.1']
    #allocation5 [shape = 's32[1]{0}', space=sflag, size = 0x4, scoped, tag = 'scoped memory for tpu_custom_call.1']
    #allocation6 [shape = 'u8[262144]{0}', space=vmem, size = 0x40000, scoped, tag = 'input window, operand 1, single buffered']
    #allocation7 [shape = 's32[1]{0}', space=sflag, size = 0x4, scoped, tag = 'scoped memory for tpu_custom_call.1']
    #allocation8 [shape = 'u8[262144]{0}', space=vmem, size = 0x40000, scoped, tag = 'input window, operand 3, single buffered']
    #allocation9 [shape = 'u8[65536]{0}', space=vmem, size = 0x10000, scoped, tag = 'input window, operand 5, single buffered']
    #allocation10 [shape = 's32[1]{0}', space=sflag, size = 0x4, scoped, tag = 'scoped memory for tpu_custom_call.1']
    #allocation11 [shape = 'u8[1024]{0}', space=vmem, size = 0x400, scoped, tag = 'output window, operand 0, single buffered']
    %14 = vsyncpa [#allocation4], 0
    %15 = vsyncpa [#allocation7], 0
    %16 = vsyncpa [#allocation10], 0
    %17 = vsyncpa [#allocation5], 0
    // Predicated region
    $region2: #{tpu_custom_call.1} parent=1 // pred_check
      _
    $region3: #{tpu_custom_call.1} parent=1 // pred_check_branch
      %19 = sbr.rel (0) target = $region5
    $region4: #{tpu_custom_call.1} parent=1 // pred_region
      %s21 = ssub.s32 512, 512
      %22 = vsyncadd [#allocation4], %s21
      %s23 = sshll.u32 [#allocation3], 4
      %s24 = int_to_ptr.vmem [resolvable:$true] %s23
      %29 = dma.hbm_to_vmem [thread:$0]  %s0, 512, %s24, [#allocation4], 256, 256, 16
    $region5: #{tpu_custom_call.1} parent=1 // pred_fallthru
      _
    // Predicated region
    $region6: #{tpu_custom_call.1} parent=1 // pred_check
      _
    $region7: #{tpu_custom_call.1} parent=1 // pred_check_branch
      %31 = sbr.rel (0) target = $region9
    $region8: #{tpu_custom_call.1} parent=1 // pred_region
      %s33 = ssub.s32 8192, 8192
      %34 = vsyncadd [#allocation7], %s33
      %s35 = sshll.u32 [#allocation6], 4
      %s36 = int_to_ptr.vmem [resolvable:$true] %s35
      %41 = dma.hbm_to_vmem [thread:$0]  %s1, 8192, %s36, [#allocation7], 256, 256, 16
    $region9: #{tpu_custom_call.1} parent=1 // pred_fallthru
      _
    // Predicated region
    $region10: #{tpu_custom_call.1} parent=1 // pred_check
      _
    $region11: #{tpu_custom_call.1} parent=1 // pred_check_branch
      %43 = sbr.rel (0) target = $region13
    $region12: #{tpu_custom_call.1} parent=1 // pred_region
      _
    $region13: #{tpu_custom_call.1} parent=1 // pred_fallthru
      _
    // Predicated region
    $region14: #{tpu_custom_call.1} parent=1 // pred_check
      _
    $region15: #{tpu_custom_call.1} parent=1 // pred_check_branch
      %45 = sbr.rel (0) target = $region17
    $region16: #{tpu_custom_call.1} parent=1 // pred_region
      %s47 = ssub.s32 8192, 8192
      %48 = vsyncadd [#allocation7], %s47
      %s49 = sshll.u32 [#allocation8], 4
      %s50 = int_to_ptr.vmem [resolvable:$true] %s49
      %55 = dma.hbm_to_vmem [thread:$0]  %s3, 8192, %s50, [#allocation7], 128, 128, 8
    $region17: #{tpu_custom_call.1} parent=1 // pred_fallthru
      _
    // Predicated region
    $region18: #{tpu_custom_call.1} parent=1 // pred_check
      _
    $region19: #{tpu_custom_call.1} parent=1 // pred_check_branch
      %57 = sbr.rel (0) target = $region21
    $region20: #{tpu_custom_call.1} parent=1 // pred_region
      _
    $region21: #{tpu_custom_call.1} parent=1 // pred_fallthru
      _
    // Predicated region
    $region22: #{tpu_custom_call.1} parent=1 // pred_check
      _
    $region23: #{tpu_custom_call.1} parent=1 // pred_check_branch
      %59 = sbr.rel (0) target = $region25
    $region24: #{tpu_custom_call.1} parent=1 // pred_region
      %s61 = ssub.s32 2048, 2048
      %62 = vsyncadd [#allocation10], %s61
      %s63 = sshll.u32 [#allocation9], 4
      %s64 = int_to_ptr.vmem [resolvable:$true] %s63
      %69 = dma.hbm_to_vmem [thread:$0]  %s5, 2048, %s64, [#allocation10], 64, 64, 4
    $region25: #{tpu_custom_call.1} parent=1 // pred_fallthru
      _
    // Predicated region
    $region26: #{tpu_custom_call.1} parent=1 // pred_check
      _
    $region27: #{tpu_custom_call.1} parent=1 // pred_check_branch
      %71 = sbr.rel (0) target = $region29
    $region28: #{tpu_custom_call.1} parent=1 // pred_region
      _
    $region29: #{tpu_custom_call.1} parent=1 // pred_fallthru
      _
    // Predicated region
    $region30: #{tpu_custom_call.1} parent=1 // pred_check
      _
    $region31: #{tpu_custom_call.1} parent=1 // pred_check_branch
      %73 = sbr.rel (0) target = $region33
    $region32: #{tpu_custom_call.1} parent=1 // pred_region
      _
    $region33: #{tpu_custom_call.1} parent=1 // pred_fallthru
      _
    // Predicated region
    $region34: #{tpu_custom_call.1} parent=1 // pred_check
      _
    $region35: #{tpu_custom_call.1} parent=1 // pred_check_branch
      %75 = sbr.rel (0) target = $region37
    $region36: #{tpu_custom_call.1} parent=1 // pred_region
      _
    $region37: #{tpu_custom_call.1} parent=1 // pred_fallthru
      _
    // Predicated region
    $region38: #{tpu_custom_call.1} parent=1 // pred_check
      _
    $region39: #{tpu_custom_call.1} parent=1 // pred_check_branch
      %77 = sbr.rel (0) target = $region41
    $region40: #{tpu_custom_call.1} parent=1 // pred_region
      %78 = dma.done [#allocation4], 512
    $region41: #{tpu_custom_call.1} parent=1 // pred_fallthru
      _
    // Predicated region
    $region42: #{tpu_custom_call.1} parent=1 // pred_check
      _
    $region43: #{tpu_custom_call.1} parent=1 // pred_check_branch
      %80 = sbr.rel (0) target = $region45
    $region44: #{tpu_custom_call.1} parent=1 // pred_region
      %81 = dma.done [#allocation7], 8192
    $region45: #{tpu_custom_call.1} parent=1 // pred_fallthru
      _
    // Predicated region
    $region46: #{tpu_custom_call.1} parent=1 // pred_check
      _
    $region47: #{tpu_custom_call.1} parent=1 // pred_check_branch
      %83 = sbr.rel (0) target = $region49
    $region48: #{tpu_custom_call.1} parent=1 // pred_region
      %84 = dma.done [#allocation7], 8192
    $region49: #{tpu_custom_call.1} parent=1 // pred_fallthru
      _
    // Predicated region
    $region50: #{tpu_custom_call.1} parent=1 // pred_check
      _
    $region51: #{tpu_custom_call.1} parent=1 // pred_check_branch
      %86 = sbr.rel (0) target = $region53
    $region52: #{tpu_custom_call.1} parent=1 // pred_region
      %87 = dma.done [#allocation10], 2048
    $region53: #{tpu_custom_call.1} parent=1 // pred_fallthru
      _
    %p89 = scmp.eq.s32.totalorder 0, 0
    // Predicated region
    $region54: #{tpu_custom_call.1} parent=1 // pred_check
      %p90 = pneg %p89
    $region55: #{tpu_custom_call.1} parent=1 // pred_check_branch
      %92 = sbr.rel (%p90) target = $region57
    $region56: #{tpu_custom_call.1} parent=1 // pred_region
      %93 = vst [vmem:[#allocation2] sm:$0xf] 0.0
    $region57: #{tpu_custom_call.1} parent=1 // pred_fallthru
      _
    %v94 = vld [vmem:[#allocation3] sm:$0xff]
    %v95 = vld [vmem:[#allocation3 + $0x8] sm:$0xff]
    %v96 = vld [vmem:[#allocation3 + $0x10] sm:$0xff]
    %v97 = vld [vmem:[#allocation3 + $0x18] sm:$0xff]
    %v98 = vld [vmem:[#allocation2] sm:$0xf]
    %v99 = vrot.slane %v94, 4
    %v100 = vadd.f32 %v94, %v99
    %v101 = vrot.slane %v100, 2
    %v102 = vadd.f32 %v100, %v101
    %v103 = vrot.slane %v102, 1
    %v104 = vadd.f32 %v102, %v103
    %v105 = vrot.slane %v95, 4
    %v106 = vadd.f32 %v95, %v105
    %v107 = vrot.slane %v106, 2
    %v108 = vadd.f32 %v106, %v107
    %v109 = vrot.slane %v108, 1
    %v110 = vadd.f32 %v108, %v109
    %v111 = vrot.slane %v96, 4
    %v112 = vadd.f32 %v96, %v111
    %v113 = vrot.slane %v112, 2
    %v114 = vadd.f32 %v112, %v113
    %v115 = vrot.slane %v114, 1
    %v116 = vadd.f32 %v114, %v115
    %v117 = vrot.slane %v97, 4
    %v118 = vadd.f32 %v97, %v117
    %v119 = vrot.slane %v118, 2
    %v120 = vadd.f32 %v118, %v119
    %v121 = vrot.slane %v120, 1
    %v122 = vadd.f32 %v120, %v121
    %v127 = vcombine.low %v104, %v110
    %v129 = vunpack.c.l.s4 1983009808
    %v130 = vunpack.c.0.s8 %v129
    %v131 = vlaneseq
    %v132 = vshrl.u32 %v131, 7
    %v133 = vsub.s32 %v130, %v132
    %v134 = vrot.slane %v127, %v133
    %v135 = vcombine.low %v116, %v122
    %v137 = vunpack.c.l.s4 1983009808
    %v138 = vunpack.c.0.s8 %v137
    %v139 = vlaneseq
    %v140 = vshrl.u32 %v139, 7
    %v141 = vsub.s32 %v138, %v140
    %v142 = vrot.slane %v135, %v141
    %vm143 = vcmask 1044484
    %v144 = vsel %vm143, %v134, %v134
    %vm145 = vcmask 1046534
    %v146 = vsel %vm145, %v134, %v144
    %v147 = vrot.slane %v142, 7
    %vm148 = vcmask 1041409
    %v149 = vsel %vm148, %v147, %v146
    %vm150 = vcmask 1043459
    %v151 = vsel %vm150, %v147, %v149
    %vm152 = vcmask 1045509
    %v153 = vsel %vm152, %v147, %v151
    %vm154 = vcmask 1047559
    %v155 = vsel %vm154, %v147, %v153
    %v157 = vadd.f32 %v98, %v155
    %158 = vst [vmem:[#allocation2] sm:$0xf] %v157
    // Predicated region
    $region58: #{tpu_custom_call.1} parent=1 // pred_check
      %p159 = pneg %p89
    $region59: #{tpu_custom_call.1} parent=1 // pred_check_branch
      %161 = sbr.rel (%p159) target = $region61
    $region60: #{tpu_custom_call.1} parent=1 // pred_region
      %v162 = vld [vmem:[#allocation2] sm:$0xf]
      %v163 = vmul.f32 %v162, 0.125
      %v166 = vunpack.c.l.s4 1983009808
      %v167 = vunpack.c.0.s8 %v166
      %v168 = vlaneseq
      %v169 = vshrl.u32 %v168, 7
      %v170 = vsub.s32 %v167, %v169
      %v171 = vrot.slane %v163, %v170
      %v172 = vcombine.high %v171, %v171
      %v175 = vpack.c.bf16 %v171, %v171
      %v176 = vpack.c.bf16 %v172, %v172
      %v177 = vld [vmem:[#allocation6] sm:$0xff]
      %v178 = vld [vmem:[#allocation6 + $0x8] sm:$0xff]
      %v179 = vld [vmem:[#allocation6 + $0x10] sm:$0xff]
      %v180 = vld [vmem:[#allocation6 + $0x18] sm:$0xff]
      %v181 = vld [vmem:[#allocation6 + $0x20] sm:$0xff]
      %v182 = vld [vmem:[#allocation6 + $0x28] sm:$0xff]
      %v183 = vld [vmem:[#allocation6 + $0x30] sm:$0xff]
      %v184 = vld [vmem:[#allocation6 + $0x38] sm:$0xff]
      %v185 = vld [vmem:[#allocation6 + $0x40] sm:$0xff]
      %v186 = vld [vmem:[#allocation6 + $0x48] sm:$0xff]
      %v187 = vld [vmem:[#allocation6 + $0x50] sm:$0xff]
      %v188 = vld [vmem:[#allocation6 + $0x58] sm:$0xff]
      %v189 = vld [vmem:[#allocation6 + $0x60] sm:$0xff]
      %v190 = vld [vmem:[#allocation6 + $0x68] sm:$0xff]
      %v191 = vld [vmem:[#allocation6 + $0x70] sm:$0xff]
      %v192 = vld [vmem:[#allocation6 + $0x78] sm:$0xff]
      %v193 = vld [vmem:[#allocation6 + $0x80] sm:$0xff]
      %v194 = vld [vmem:[#allocation6 + $0x88] sm:$0xff]
      %v195 = vld [vmem:[#allocation6 + $0x90] sm:$0xff]
      %v196 = vld [vmem:[#allocation6 + $0x98] sm:$0xff]
      %v197 = vld [vmem:[#allocation6 + $0xa0] sm:$0xff]
      %v198 = vld [vmem:[#allocation6 + $0xa8] sm:$0xff]
      %v199 = vld [vmem:[#allocation6 + $0xb0] sm:$0xff]
      %v200 = vld [vmem:[#allocation6 + $0xb8] sm:$0xff]
      %v201 = vld [vmem:[#allocation6 + $0xc0] sm:$0xff]
      %v202 = vld [vmem:[#allocation6 + $0xc8] sm:$0xff]
      %v203 = vld [vmem:[#allocation6 + $0xd0] sm:$0xff]
      %v204 = vld [vmem:[#allocation6 + $0xd8] sm:$0xff]
      %v205 = vld [vmem:[#allocation6 + $0xe0] sm:$0xff]
      %v206 = vld [vmem:[#allocation6 + $0xe8] sm:$0xff]
      %v207 = vld [vmem:[#allocation6 + $0xf0] sm:$0xff]
      %v208 = vld [vmem:[#allocation6 + $0xf8] sm:$0xff]
      %v209 = vld [vmem:[#allocation6 + $0x100] sm:$0xff]
      %v210 = vld [vmem:[#allocation6 + $0x108] sm:$0xff]
      %v211 = vld [vmem:[#allocation6 + $0x110] sm:$0xff]
      %v212 = vld [vmem:[#allocation6 + $0x118] sm:$0xff]
      %v213 = vld [vmem:[#allocation6 + $0x120] sm:$0xff]
      %v214 = vld [vmem:[#allocation6 + $0x128] sm:$0xff]
      %v215 = vld [vmem:[#allocation6 + $0x130] sm:$0xff]
      %v216 = vld [vmem:[#allocation6 + $0x138] sm:$0xff]
      %v217 = vld [vmem:[#allocation6 + $0x140] sm:$0xff]
      %v218 = vld [vmem:[#allocation6 + $0x148] sm:$0xff]
      %v219 = vld [vmem:[#allocation6 + $0x150] sm:$0xff]
      %v220 = vld [vmem:[#allocation6 + $0x158] sm:$0xff]
      %v221 = vld [vmem:[#allocation6 + $0x160] sm:$0xff]
      %v222 = vld [vmem:[#allocation6 + $0x168] sm:$0xff]
      %v223 = vld [vmem:[#allocation6 + $0x170] sm:$0xff]
      %v224 = vld [vmem:[#allocation6 + $0x178] sm:$0xff]
      %v225 = vld [vmem:[#allocation6 + $0x180] sm:$0xff]
      %v226 = vld [vmem:[#allocation6 + $0x188] sm:$0xff]
      %v227 = vld [vmem:[#allocation6 + $0x190] sm:$0xff]
      %v228 = vld [vmem:[#allocation6 + $0x198] sm:$0xff]
      %v229 = vld [vmem:[#allocation6 + $0x1a0] sm:$0xff]
      %v230 = vld [vmem:[#allocation6 + $0x1a8] sm:$0xff]
      %v231 = vld [vmem:[#allocation6 + $0x1b0] sm:$0xff]
      %v232 = vld [vmem:[#allocation6 + $0x1b8] sm:$0xff]
      %v233 = vld [vmem:[#allocation6 + $0x1c0] sm:$0xff]
      %v234 = vld [vmem:[#allocation6 + $0x1c8] sm:$0xff]
      %v235 = vld [vmem:[#allocation6 + $0x1d0] sm:$0xff]
      %v236 = vld [vmem:[#allocation6 + $0x1d8] sm:$0xff]
      %v237 = vld [vmem:[#allocation6 + $0x1e0] sm:$0xff]
      %v238 = vld [vmem:[#allocation6 + $0x1e8] sm:$0xff]
      %v239 = vld [vmem:[#allocation6 + $0x1f0] sm:$0xff]
      %v240 = vld [vmem:[#allocation6 + $0x1f8] sm:$0xff]
      %v241 = vld [vmem:[%s2] sm:$0xf]
      %v243 = vlaneseq
      %v244 = vshrl.u32 %v243, 7
      %v245 = vsub.s32 0, %v244
      %v246 = vrot.slane %v241, %v245
      %v247 = vlaneseq
      %v248 = vshrl.u32 %v247, 7
      %v249 = vsub.s32 1, %v248
      %v250 = vrot.slane %v241, %v249
      %v251 = vlaneseq
      %v252 = vshrl.u32 %v251, 7
      %v253 = vsub.s32 2, %v252
      %v254 = vrot.slane %v241, %v253
      %v255 = vlaneseq
      %v256 = vshrl.u32 %v255, 7
      %v257 = vsub.s32 3, %v256
      %v258 = vrot.slane %v241, %v257
      %v327 = vunpack.c.l.b16 %v177
      %v328 = vunpack.c.h.b16 %v177
      %v329 = vunpack.c.l.b16 %v178
      %v330 = vunpack.c.h.b16 %v178
      %v331 = vunpack.c.l.b16 %v179
      %v332 = vunpack.c.h.b16 %v179
      %v333 = vunpack.c.l.b16 %v180
      %v334 = vunpack.c.h.b16 %v180
      %v335 = vunpack.c.l.b16 %v181
      %v336 = vunpack.c.h.b16 %v181
      %v337 = vunpack.c.l.b16 %v182
      %v338 = vunpack.c.h.b16 %v182
      %v339 = vunpack.c.l.b16 %v183
      %v340 = vunpack.c.h.b16 %v183
      %v341 = vunpack.c.l.b16 %v184
      %v342 = vunpack.c.h.b16 %v184
      %v343 = vunpack.c.l.b16 %v185
      %v344 = vunpack.c.h.b16 %v185
      %v345 = vunpack.c.l.b16 %v186
      %v346 = vunpack.c.h.b16 %v186
      %v347 = vunpack.c.l.b16 %v187
      %v348 = vunpack.c.h.b16 %v187
      %v349 = vunpack.c.l.b16 %v188
      %v350 = vunpack.c.h.b16 %v188
      %v351 = vunpack.c.l.b16 %v189
      %v352 = vunpack.c.h.b16 %v189
      %v353 = vunpack.c.l.b16 %v190
      %v354 = vunpack.c.h.b16 %v190
      %v355 = vunpack.c.l.b16 %v191
      %v356 = vunpack.c.h.b16 %v191
      %v357 = vunpack.c.l.b16 %v192
      %v358 = vunpack.c.h.b16 %v192
      %v359 = vunpack.c.l.b16 %v193
      %v360 = vunpack.c.h.b16 %v193
      %v361 = vunpack.c.l.b16 %v194
      %v362 = vunpack.c.h.b16 %v194
      %v363 = vunpack.c.l.b16 %v195
      %v364 = vunpack.c.h.b16 %v195
      %v365 = vunpack.c.l.b16 %v196
      %v366 = vunpack.c.h.b16 %v196
      %v367 = vunpack.c.l.b16 %v197
      %v368 = vunpack.c.h.b16 %v197
      %v369 = vunpack.c.l.b16 %v198
      %v370 = vunpack.c.h.b16 %v198
      %v371 = vunpack.c.l.b16 %v199
      %v372 = vunpack.c.h.b16 %v199
      %v373 = vunpack.c.l.b16 %v200
      %v374 = vunpack.c.h.b16 %v200
      %v375 = vunpack.c.l.b16 %v201
      %v376 = vunpack.c.h.b16 %v201
      %v377 = vunpack.c.l.b16 %v202
      %v378 = vunpack.c.h.b16 %v202
      %v379 = vunpack.c.l.b16 %v203
      %v380 = vunpack.c.h.b16 %v203
      %v381 = vunpack.c.l.b16 %v204
      %v382 = vunpack.c.h.b16 %v204
      %v383 = vunpack.c.l.b16 %v205
      %v384 = vunpack.c.h.b16 %v205
      %v385 = vunpack.c.l.b16 %v206
      %v386 = vunpack.c.h.b16 %v206
      %v387 = vunpack.c.l.b16 %v207
      %v388 = vunpack.c.h.b16 %v207
      %v389 = vunpack.c.l.b16 %v208
      %v390 = vunpack.c.h.b16 %v208
      %v391 = vunpack.c.l.b16 %v209
      %v392 = vunpack.c.h.b16 %v209
      %v393 = vunpack.c.l.b16 %v210
      %v394 = vunpack.c.h.b16 %v210
      %v395 = vunpack.c.l.b16 %v211
      %v396 = vunpack.c.h.b16 %v211
      %v397 = vunpack.c.l.b16 %v212
      %v398 = vunpack.c.h.b16 %v212
      %v399 = vunpack.c.l.b16 %v213
      %v400 = vunpack.c.h.b16 %v213
      %v401 = vunpack.c.l.b16 %v214
      %v402 = vunpack.c.h.b16 %v214
      %v403 = vunpack.c.l.b16 %v215
      %v404 = vunpack.c.h.b16 %v215
      %v405 = vunpack.c.l.b16 %v216
      %v406 = vunpack.c.h.b16 %v216
      %v407 = vunpack.c.l.b16 %v217
      %v408 = vunpack.c.h.b16 %v217
      %v409 = vunpack.c.l.b16 %v218
      %v410 = vunpack.c.h.b16 %v218
      %v411 = vunpack.c.l.b16 %v219
      %v412 = vunpack.c.h.b16 %v219
      %v413 = vunpack.c.l.b16 %v220
      %v414 = vunpack.c.h.b16 %v220
      %v415 = vunpack.c.l.b16 %v221
      %v416 = vunpack.c.h.b16 %v221
      %v417 = vunpack.c.l.b16 %v222
      %v418 = vunpack.c.h.b16 %v222
      %v419 = vunpack.c.l.b16 %v223
      %v420 = vunpack.c.h.b16 %v223
      %v421 = vunpack.c.l.b16 %v224
      %v422 = vunpack.c.h.b16 %v224
      %v423 = vunpack.c.l.b16 %v225
      %v424 = vunpack.c.h.b16 %v225
      %v425 = vunpack.c.l.b16 %v226
      %v426 = vunpack.c.h.b16 %v226
      %v427 = vunpack.c.l.b16 %v227
      %v428 = vunpack.c.h.b16 %v227
      %v429 = vunpack.c.l.b16 %v228
      %v430 = vunpack.c.h.b16 %v228
      %v431 = vunpack.c.l.b16 %v229
      %v432 = vunpack.c.h.b16 %v229
      %v433 = vunpack.c.l.b16 %v230
      %v434 = vunpack.c.h.b16 %v230
      %v435 = vunpack.c.l.b16 %v231
      %v436 = vunpack.c.h.b16 %v231
      %v437 = vunpack.c.l.b16 %v232
      %v438 = vunpack.c.h.b16 %v232
      %v439 = vunpack.c.l.b16 %v233
      %v440 = vunpack.c.h.b16 %v233
      %v441 = vunpack.c.l.b16 %v234
      %v442 = vunpack.c.h.b16 %v234
      %v443 = vunpack.c.l.b16 %v235
      %v444 = vunpack.c.h.b16 %v235
      %v445 = vunpack.c.l.b16 %v236
      %v446 = vunpack.c.h.b16 %v236
      %v447 = vunpack.c.l.b16 %v237
      %v448 = vunpack.c.h.b16 %v237
      %v449 = vunpack.c.l.b16 %v238
      %v450 = vunpack.c.h.b16 %v238
      %v451 = vunpack.c.l.b16 %v239
      %v452 = vunpack.c.h.b16 %v239
      %v453 = vunpack.c.l.b16 %v240
      %v454 = vunpack.c.h.b16 %v240
      %v455 = vpack.c.b16 %v331, %v327
      %v456 = vpack.c.b16 %v332, %v328
      %v457 = vpack.c.b16 %v333, %v329
      %v458 = vpack.c.b16 %v334, %v330
      %v459 = vpack.c.b16 %v339, %v335
      %v460 = vpack.c.b16 %v340, %v336
      %v461 = vpack.c.b16 %v341, %v337
      %v462 = vpack.c.b16 %v342, %v338
      %v463 = vpack.c.b16 %v347, %v343
      %v464 = vpack.c.b16 %v348, %v344
      %v465 = vpack.c.b16 %v349, %v345
      %v466 = vpack.c.b16 %v350, %v346
      %v467 = vpack.c.b16 %v355, %v351
      %v468 = vpack.c.b16 %v356, %v352
      %v469 = vpack.c.b16 %v357, %v353
      %v470 = vpack.c.b16 %v358, %v354
      %v471 = vpack.c.b16 %v363, %v359
      %v472 = vpack.c.b16 %v364, %v360
      %v473 = vpack.c.b16 %v365, %v361
      %v474 = vpack.c.b16 %v366, %v362
      %v475 = vpack.c.b16 %v371, %v367
      %v476 = vpack.c.b16 %v372, %v368
      %v477 = vpack.c.b16 %v373, %v369
      %v478 = vpack.c.b16 %v374, %v370
      %v479 = vpack.c.b16 %v379, %v375
      %v480 = vpack.c.b16 %v380, %v376
      %v481 = vpack.c.b16 %v381, %v377
      %v482 = vpack.c.b16 %v382, %v378
      %v483 = vpack.c.b16 %v387, %v383
      %v484 = vpack.c.b16 %v388, %v384
      %v485 = vpack.c.b16 %v389, %v385
      %v486 = vpack.c.b16 %v390, %v386
      %v487 = vpack.c.b16 %v395, %v391
      %v488 = vpack.c.b16 %v396, %v392
      %v489 = vpack.c.b16 %v397, %v393
      %v490 = vpack.c.b16 %v398, %v394
      %v491 = vpack.c.b16 %v403, %v399
      %v492 = vpack.c.b16 %v404, %v400
      %v493 = vpack.c.b16 %v405, %v401
      %v494 = vpack.c.b16 %v406, %v402
      %v495 = vpack.c.b16 %v411, %v407
      %v496 = vpack.c.b16 %v412, %v408
      %v497 = vpack.c.b16 %v413, %v409
      %v498 = vpack.c.b16 %v414, %v410
      %v499 = vpack.c.b16 %v419, %v415
      %v500 = vpack.c.b16 %v420, %v416
      %v501 = vpack.c.b16 %v421, %v417
      %v502 = vpack.c.b16 %v422, %v418
      %v503 = vpack.c.b16 %v427, %v423
      %v504 = vpack.c.b16 %v428, %v424
      %v505 = vpack.c.b16 %v429, %v425
      %v506 = vpack.c.b16 %v430, %v426
      %v507 = vpack.c.b16 %v435, %v431
      %v508 = vpack.c.b16 %v436, %v432
      %v509 = vpack.c.b16 %v437, %v433
      %v510 = vpack.c.b16 %v438, %v434
      %v511 = vpack.c.b16 %v443, %v439
      %v512 = vpack.c.b16 %v444, %v440
      %v513 = vpack.c.b16 %v445, %v441
      %v514 = vpack.c.b16 %v446, %v442
      %v515 = vpack.c.b16 %v451, %v447
      %v516 = vpack.c.b16 %v452, %v448
      %v517 = vpack.c.b16 %v453, %v449
      %v518 = vpack.c.b16 %v454, %v450
      %583 = vmatprep.subr.bf16.mxu0 %v456
      %584 = vmatpush1.bf16.msra.mxu0 %v455
      %585 = vmatprep.subr.bf16.mxu0 %v460
      %586 = vmatpush1.bf16.msra.mxu0 %v459
      %587 = vmatprep.subr.bf16.mxu0 %v464
      %588 = vmatpush1.bf16.msra.mxu0 %v463
      %589 = vmatprep.subr.bf16.mxu0 %v468
      %590 = vmatpush1.bf16.msra.mxu0 %v467
      %591 = vmatprep.subr.bf16.mxu0 %v472
      %592 = vmatpush1.bf16.msra.mxu0 %v471
      %593 = vmatprep.subr.bf16.mxu0 %v476
      %594 = vmatpush1.bf16.msra.mxu0 %v475
      %595 = vmatprep.subr.bf16.mxu0 %v480
      %596 = vmatpush1.bf16.msra.mxu0 %v479
      %597 = vmatprep.subr.bf16.mxu0 %v484
      %598 = vmatpush1.bf16.msra.mxu0 %v483
      %599 = vmatprep.subr.bf16.mxu0 %v488
      %600 = vmatpush1.bf16.msra.mxu0 %v487
      %601 = vmatprep.subr.bf16.mxu0 %v492
      %602 = vmatpush1.bf16.msra.mxu0 %v491
      %603 = vmatprep.subr.bf16.mxu0 %v496
      %604 = vmatpush1.bf16.msra.mxu0 %v495
      %605 = vmatprep.subr.bf16.mxu0 %v500
      %606 = vmatpush1.bf16.msra.mxu0 %v499
      %607 = vmatprep.subr.bf16.mxu0 %v504
      %608 = vmatpush1.bf16.msra.mxu0 %v503
      %609 = vmatprep.subr.bf16.mxu0 %v508
      %610 = vmatpush1.bf16.msra.mxu0 %v507
      %611 = vmatprep.subr.bf16.mxu0 %v512
      %612 = vmatpush1.bf16.msra.mxu0 %v511
      %613 = vmatprep.subr.bf16.mxu0 %v516
      %614 = vmatpush1.bf16.msra.mxu0 %v515
      %615 = vmatprep.mubr.bf16.mxu0 %v176
      %616 = vmatmul.mubr.bf16.gmra.mrb[0].mxu0 %v175
      %v617 = vpop.f32.mrb[0].mxu0
      %v618 = vadd.f32 %v246, %v617
      %v619 = vpop.f32.mrb[0].mxu0
      %v620 = vadd.f32 %v250, %v619
      %v621 = vpop.f32.mrb[0].mxu0
      %v622 = vpop.f32.mrb[0].mxu0
      %623 = vdwg.mxu0
      %624 = vmatprep.subr.bf16.mxu0 %v458
      %625 = vmatpush1.bf16.msra.mxu0 %v457
      %626 = vmatprep.subr.bf16.mxu0 %v462
      %627 = vmatpush1.bf16.msra.mxu0 %v461
      %628 = vmatprep.subr.bf16.mxu0 %v466
      %629 = vmatpush1.bf16.msra.mxu0 %v465
      %630 = vmatprep.subr.bf16.mxu0 %v470
      %631 = vmatpush1.bf16.msra.mxu0 %v469
      %632 = vmatprep.subr.bf16.mxu0 %v474
      %633 = vmatpush1.bf16.msra.mxu0 %v473
      %634 = vmatprep.subr.bf16.mxu0 %v478
      %635 = vmatpush1.bf16.msra.mxu0 %v477
      %636 = vmatprep.subr.bf16.mxu0 %v482
      %637 = vmatpush1.bf16.msra.mxu0 %v481
      %638 = vmatprep.subr.bf16.mxu0 %v486
      %639 = vmatpush1.bf16.msra.mxu0 %v485
      %640 = vmatprep.subr.bf16.mxu0 %v490
      %641 = vmatpush1.bf16.msra.mxu0 %v489
      %642 = vmatprep.subr.bf16.mxu0 %v494
      %643 = vmatpush1.bf16.msra.mxu0 %v493
      %644 = vmatprep.subr.bf16.mxu0 %v498
      %645 = vmatpush1.bf16.msra.mxu0 %v497
      %646 = vmatprep.subr.bf16.mxu0 %v502
      %647 = vmatpush1.bf16.msra.mxu0 %v501
      %648 = vmatprep.subr.bf16.mxu0 %v506
      %649 = vmatpush1.bf16.msra.mxu0 %v505
      %650 = vmatprep.subr.bf16.mxu0 %v510
      %651 = vmatpush1.bf16.msra.mxu0 %v509
      %652 = vmatprep.subr.bf16.mxu0 %v514
      %653 = vmatpush1.bf16.msra.mxu0 %v513
      %654 = vmatprep.subr.bf16.mxu0 %v518
      %655 = vmatpush1.bf16.msra.mxu0 %v517
      %656 = vmatprep.mubr.bf16.mxu0 %v176
      %657 = vmatmul.mubr.bf16.gmra.mrb[0].mxu0 %v175
      %v658 = vpop.f32.mrb[0].mxu0
      %v659 = vadd.f32 %v254, %v658
      %v660 = vpop.f32.mrb[0].mxu0
      %v661 = vadd.f32 %v258, %v660
      %v662 = vpop.f32.mrb[0].mxu0
      %v663 = vpop.f32.mrb[0].mxu0
      %664 = vdwg.mxu0
      %v665 = vmax.f32 %v618, 0.0
      %v666 = vmax.f32 %v620, 0.0
      %v667 = vmax.f32 %v659, 0.0
      %v668 = vmax.f32 %v661, 0.0
      %v669 = vpack.c.bf16 %v665, %v665
      %v670 = vpack.c.bf16 %v666, %v666
      %v671 = vpack.c.bf16 %v667, %v667
      %v672 = vpack.c.bf16 %v668, %v668
      %v673 = vld [vmem:[#allocation8] sm:$0xff]
      %v674 = vld [vmem:[#allocation8 + $0x8] sm:$0xff]
      %v675 = vld [vmem:[#allocation8 + $0x10] sm:$0xff]
      %v676 = vld [vmem:[#allocation8 + $0x18] sm:$0xff]
      %v677 = vld [vmem:[#allocation8 + $0x20] sm:$0xff]
      %v678 = vld [vmem:[#allocation8 + $0x28] sm:$0xff]
      %v679 = vld [vmem:[#allocation8 + $0x30] sm:$0xff]
      %v680 = vld [vmem:[#allocation8 + $0x38] sm:$0xff]
      %v681 = vld [vmem:[#allocation8 + $0x40] sm:$0xff]
      %v682 = vld [vmem:[#allocation8 + $0x48] sm:$0xff]
      %v683 = vld [vmem:[#allocation8 + $0x50] sm:$0xff]
      %v684 = vld [vmem:[#allocation8 + $0x58] sm:$0xff]
      %v685 = vld [vmem:[#allocation8 + $0x60] sm:$0xff]
      %v686 = vld [vmem:[#allocation8 + $0x68] sm:$0xff]
      %v687 = vld [vmem:[#allocation8 + $0x70] sm:$0xff]
      %v688 = vld [vmem:[#allocation8 + $0x78] sm:$0xff]
      %v689 = vld [vmem:[#allocation8 + $0x80] sm:$0xff]
      %v690 = vld [vmem:[#allocation8 + $0x88] sm:$0xff]
      %v691 = vld [vmem:[#allocation8 + $0x90] sm:$0xff]
      %v692 = vld [vmem:[#allocation8 + $0x98] sm:$0xff]
      %v693 = vld [vmem:[#allocation8 + $0xa0] sm:$0xff]
      %v694 = vld [vmem:[#allocation8 + $0xa8] sm:$0xff]
      %v695 = vld [vmem:[#allocation8 + $0xb0] sm:$0xff]
      %v696 = vld [vmem:[#allocation8 + $0xb8] sm:$0xff]
      %v697 = vld [vmem:[#allocation8 + $0xc0] sm:$0xff]
      %v698 = vld [vmem:[#allocation8 + $0xc8] sm:$0xff]
      %v699 = vld [vmem:[#allocation8 + $0xd0] sm:$0xff]
      %v700 = vld [vmem:[#allocation8 + $0xd8] sm:$0xff]
      %v701 = vld [vmem:[#allocation8 + $0xe0] sm:$0xff]
      %v702 = vld [vmem:[#allocation8 + $0xe8] sm:$0xff]
      %v703 = vld [vmem:[#allocation8 + $0xf0] sm:$0xff]
      %v704 = vld [vmem:[#allocation8 + $0xf8] sm:$0xff]
      %v705 = vld [vmem:[#allocation8 + $0x100] sm:$0xff]
      %v706 = vld [vmem:[#allocation8 + $0x108] sm:$0xff]
      %v707 = vld [vmem:[#allocation8 + $0x110] sm:$0xff]
      %v708 = vld [vmem:[#allocation8 + $0x118] sm:$0xff]
      %v709 = vld [vmem:[#allocation8 + $0x120] sm:$0xff]
      %v710 = vld [vmem:[#allocation8 + $0x128] sm:$0xff]
      %v711 = vld [vmem:[#allocation8 + $0x130] sm:$0xff]
      %v712 = vld [vmem:[#allocation8 + $0x138] sm:$0xff]
      %v713 = vld [vmem:[#allocation8 + $0x140] sm:$0xff]
      %v714 = vld [vmem:[#allocation8 + $0x148] sm:$0xff]
      %v715 = vld [vmem:[#allocation8 + $0x150] sm:$0xff]
      %v716 = vld [vmem:[#allocation8 + $0x158] sm:$0xff]
      %v717 = vld [vmem:[#allocation8 + $0x160] sm:$0xff]
      %v718 = vld [vmem:[#allocation8 + $0x168] sm:$0xff]
      %v719 = vld [vmem:[#allocation8 + $0x170] sm:$0xff]
      %v720 = vld [vmem:[#allocation8 + $0x178] sm:$0xff]
      %v721 = vld [vmem:[#allocation8 + $0x180] sm:$0xff]
      %v722 = vld [vmem:[#allocation8 + $0x188] sm:$0xff]
      %v723 = vld [vmem:[#allocation8 + $0x190] sm:$0xff]
      %v724 = vld [vmem:[#allocation8 + $0x198] sm:$0xff]
      %v725 = vld [vmem:[#allocation8 + $0x1a0] sm:$0xff]
      %v726 = vld [vmem:[#allocation8 + $0x1a8] sm:$0xff]
      %v727 = vld [vmem:[#allocation8 + $0x1b0] sm:$0xff]
      %v728 = vld [vmem:[#allocation8 + $0x1b8] sm:$0xff]
      %v729 = vld [vmem:[#allocation8 + $0x1c0] sm:$0xff]
      %v730 = vld [vmem:[#allocation8 + $0x1c8] sm:$0xff]
      %v731 = vld [vmem:[#allocation8 + $0x1d0] sm:$0xff]
      %v732 = vld [vmem:[#allocation8 + $0x1d8] sm:$0xff]
      %v733 = vld [vmem:[#allocation8 + $0x1e0] sm:$0xff]
      %v734 = vld [vmem:[#allocation8 + $0x1e8] sm:$0xff]
      %v735 = vld [vmem:[#allocation8 + $0x1f0] sm:$0xff]
      %v736 = vld [vmem:[#allocation8 + $0x1f8] sm:$0xff]
      %v737 = vld [vmem:[%s4] sm:$0x3]
      %v739 = vlaneseq
      %v740 = vshrl.u32 %v739, 7
      %v741 = vsub.s32 0, %v740
      %v742 = vrot.slane %v737, %v741
      %v743 = vlaneseq
      %v744 = vshrl.u32 %v743, 7
      %v745 = vsub.s32 1, %v744
      %v746 = vrot.slane %v737, %v745
      %v813 = vunpack.c.l.b16 %v673
      %v814 = vunpack.c.h.b16 %v673
      %v815 = vunpack.c.l.b16 %v674
      %v816 = vunpack.c.h.b16 %v674
      %v817 = vunpack.c.l.b16 %v675
      %v818 = vunpack.c.h.b16 %v675
      %v819 = vunpack.c.l.b16 %v676
      %v820 = vunpack.c.h.b16 %v676
      %v821 = vunpack.c.l.b16 %v677
      %v822 = vunpack.c.h.b16 %v677
      %v823 = vunpack.c.l.b16 %v678
      %v824 = vunpack.c.h.b16 %v678
      %v825 = vunpack.c.l.b16 %v679
      %v826 = vunpack.c.h.b16 %v679
      %v827 = vunpack.c.l.b16 %v680
      %v828 = vunpack.c.h.b16 %v680
      %v829 = vunpack.c.l.b16 %v681
      %v830 = vunpack.c.h.b16 %v681
      %v831 = vunpack.c.l.b16 %v682
      %v832 = vunpack.c.h.b16 %v682
      %v833 = vunpack.c.l.b16 %v683
      %v834 = vunpack.c.h.b16 %v683
      %v835 = vunpack.c.l.b16 %v684
      %v836 = vunpack.c.h.b16 %v684
      %v837 = vunpack.c.l.b16 %v685
      %v838 = vunpack.c.h.b16 %v685
      %v839 = vunpack.c.l.b16 %v686
      %v840 = vunpack.c.h.b16 %v686
      %v841 = vunpack.c.l.b16 %v687
      %v842 = vunpack.c.h.b16 %v687
      %v843 = vunpack.c.l.b16 %v688
      %v844 = vunpack.c.h.b16 %v688
      %v845 = vunpack.c.l.b16 %v689
      %v846 = vunpack.c.h.b16 %v689
      %v847 = vunpack.c.l.b16 %v690
      %v848 = vunpack.c.h.b16 %v690
      %v849 = vunpack.c.l.b16 %v691
      %v850 = vunpack.c.h.b16 %v691
      %v851 = vunpack.c.l.b16 %v692
      %v852 = vunpack.c.h.b16 %v692
      %v853 = vunpack.c.l.b16 %v693
      %v854 = vunpack.c.h.b16 %v693
      %v855 = vunpack.c.l.b16 %v694
      %v856 = vunpack.c.h.b16 %v694
      %v857 = vunpack.c.l.b16 %v695
      %v858 = vunpack.c.h.b16 %v695
      %v859 = vunpack.c.l.b16 %v696
      %v860 = vunpack.c.h.b16 %v696
      %v861 = vunpack.c.l.b16 %v697
      %v862 = vunpack.c.h.b16 %v697
      %v863 = vunpack.c.l.b16 %v698
      %v864 = vunpack.c.h.b16 %v698
      %v865 = vunpack.c.l.b16 %v699
      %v866 = vunpack.c.h.b16 %v699
      %v867 = vunpack.c.l.b16 %v700
      %v868 = vunpack.c.h.b16 %v700
      %v869 = vunpack.c.l.b16 %v701
      %v870 = vunpack.c.h.b16 %v701
      %v871 = vunpack.c.l.b16 %v702
      %v872 = vunpack.c.h.b16 %v702
      %v873 = vunpack.c.l.b16 %v703
      %v874 = vunpack.c.h.b16 %v703
      %v875 = vunpack.c.l.b16 %v704
      %v876 = vunpack.c.h.b16 %v704
      %v877 = vunpack.c.l.b16 %v705
      %v878 = vunpack.c.h.b16 %v705
      %v879 = vunpack.c.l.b16 %v706
      %v880 = vunpack.c.h.b16 %v706
      %v881 = vunpack.c.l.b16 %v707
      %v882 = vunpack.c.h.b16 %v707
      %v883 = vunpack.c.l.b16 %v708
      %v884 = vunpack.c.h.b16 %v708
      %v885 = vunpack.c.l.b16 %v709
      %v886 = vunpack.c.h.b16 %v709
      %v887 = vunpack.c.l.b16 %v710
      %v888 = vunpack.c.h.b16 %v710
      %v889 = vunpack.c.l.b16 %v711
      %v890 = vunpack.c.h.b16 %v711
      %v891 = vunpack.c.l.b16 %v712
      %v892 = vunpack.c.h.b16 %v712
      %v893 = vunpack.c.l.b16 %v713
      %v894 = vunpack.c.h.b16 %v713
      %v895 = vunpack.c.l.b16 %v714
      %v896 = vunpack.c.h.b16 %v714
      %v897 = vunpack.c.l.b16 %v715
      %v898 = vunpack.c.h.b16 %v715
      %v899 = vunpack.c.l.b16 %v716
      %v900 = vunpack.c.h.b16 %v716
      %v901 = vunpack.c.l.b16 %v717
      %v902 = vunpack.c.h.b16 %v717
      %v903 = vunpack.c.l.b16 %v718
      %v904 = vunpack.c.h.b16 %v718
      %v905 = vunpack.c.l.b16 %v719
      %v906 = vunpack.c.h.b16 %v719
      %v907 = vunpack.c.l.b16 %v720
      %v908 = vunpack.c.h.b16 %v720
      %v909 = vunpack.c.l.b16 %v721
      %v910 = vunpack.c.h.b16 %v721
      %v911 = vunpack.c.l.b16 %v722
      %v912 = vunpack.c.h.b16 %v722
      %v913 = vunpack.c.l.b16 %v723
      %v914 = vunpack.c.h.b16 %v723
      %v915 = vunpack.c.l.b16 %v724
      %v916 = vunpack.c.h.b16 %v724
      %v917 = vunpack.c.l.b16 %v725
      %v918 = vunpack.c.h.b16 %v725
      %v919 = vunpack.c.l.b16 %v726
      %v920 = vunpack.c.h.b16 %v726
      %v921 = vunpack.c.l.b16 %v727
      %v922 = vunpack.c.h.b16 %v727
      %v923 = vunpack.c.l.b16 %v728
      %v924 = vunpack.c.h.b16 %v728
      %v925 = vunpack.c.l.b16 %v729
      %v926 = vunpack.c.h.b16 %v729
      %v927 = vunpack.c.l.b16 %v730
      %v928 = vunpack.c.h.b16 %v730
      %v929 = vunpack.c.l.b16 %v731
      %v930 = vunpack.c.h.b16 %v731
      %v931 = vunpack.c.l.b16 %v732
      %v932 = vunpack.c.h.b16 %v732
      %v933 = vunpack.c.l.b16 %v733
      %v934 = vunpack.c.h.b16 %v733
      %v935 = vunpack.c.l.b16 %v734
      %v936 = vunpack.c.h.b16 %v734
      %v937 = vunpack.c.l.b16 %v735
      %v938 = vunpack.c.h.b16 %v735
      %v939 = vunpack.c.l.b16 %v736
      %v940 = vunpack.c.h.b16 %v736
      %v941 = vpack.c.b16 %v815, %v813
      %v942 = vpack.c.b16 %v816, %v814
      %v943 = vpack.c.b16 %v819, %v817
      %v944 = vpack.c.b16 %v820, %v818
      %v945 = vpack.c.b16 %v823, %v821
      %v946 = vpack.c.b16 %v824, %v822
      %v947 = vpack.c.b16 %v827, %v825
      %v948 = vpack.c.b16 %v828, %v826
      %v949 = vpack.c.b16 %v831, %v829
      %v950 = vpack.c.b16 %v832, %v830
      %v951 = vpack.c.b16 %v835, %v833
      %v952 = vpack.c.b16 %v836, %v834
      %v953 = vpack.c.b16 %v839, %v837
      %v954 = vpack.c.b16 %v840, %v838
      %v955 = vpack.c.b16 %v843, %v841
      %v956 = vpack.c.b16 %v844, %v842
      %v957 = vpack.c.b16 %v847, %v845
      %v958 = vpack.c.b16 %v848, %v846
      %v959 = vpack.c.b16 %v851, %v849
      %v960 = vpack.c.b16 %v852, %v850
      %v961 = vpack.c.b16 %v855, %v853
      %v962 = vpack.c.b16 %v856, %v854
      %v963 = vpack.c.b16 %v859, %v857
      %v964 = vpack.c.b16 %v860, %v858
      %v965 = vpack.c.b16 %v863, %v861
      %v966 = vpack.c.b16 %v864, %v862
      %v967 = vpack.c.b16 %v867, %v865
      %v968 = vpack.c.b16 %v868, %v866
      %v969 = vpack.c.b16 %v871, %v869
      %v970 = vpack.c.b16 %v872, %v870
      %v971 = vpack.c.b16 %v875, %v873
      %v972 = vpack.c.b16 %v876, %v874
      %v973 = vpack.c.b16 %v879, %v877
      %v974 = vpack.c.b16 %v880, %v878
      %v975 = vpack.c.b16 %v883, %v881
      %v976 = vpack.c.b16 %v884, %v882
      %v977 = vpack.c.b16 %v887, %v885
      %v978 = vpack.c.b16 %v888, %v886
      %v979 = vpack.c.b16 %v891, %v889
      %v980 = vpack.c.b16 %v892, %v890
      %v981 = vpack.c.b16 %v895, %v893
      %v982 = vpack.c.b16 %v896, %v894
      %v983 = vpack.c.b16 %v899, %v897
      %v984 = vpack.c.b16 %v900, %v898
      %v985 = vpack.c.b16 %v903, %v901
      %v986 = vpack.c.b16 %v904, %v902
      %v987 = vpack.c.b16 %v907, %v905
      %v988 = vpack.c.b16 %v908, %v906
      %v989 = vpack.c.b16 %v911, %v909
      %v990 = vpack.c.b16 %v912, %v910
      %v991 = vpack.c.b16 %v915, %v913
      %v992 = vpack.c.b16 %v916, %v914
      %v993 = vpack.c.b16 %v919, %v917
      %v994 = vpack.c.b16 %v920, %v918
      %v995 = vpack.c.b16 %v923, %v921
      %v996 = vpack.c.b16 %v924, %v922
      %v997 = vpack.c.b16 %v927, %v925
      %v998 = vpack.c.b16 %v928, %v926
      %v999 = vpack.c.b16 %v931, %v929
      %v1000 = vpack.c.b16 %v932, %v930
      %v1001 = vpack.c.b16 %v935, %v933
      %v1002 = vpack.c.b16 %v936, %v934
      %v1003 = vpack.c.b16 %v939, %v937
      %v1004 = vpack.c.b16 %v940, %v938
      %1069 = vmatprep.subr.bf16.mxu0 %v942
      %1070 = vmatpush1.bf16.msra.mxu0 %v941
      %1071 = vmatprep.subr.bf16.mxu0 %v944
      %1072 = vmatpush1.bf16.msra.mxu0 %v943
      %1073 = vmatprep.subr.bf16.mxu0 %v946
      %1074 = vmatpush1.bf16.msra.mxu0 %v945
      %1075 = vmatprep.subr.bf16.mxu0 %v948
      %1076 = vmatpush1.bf16.msra.mxu0 %v947
      %1077 = vmatprep.subr.bf16.mxu0 %v950
      %1078 = vmatpush1.bf16.msra.mxu0 %v949
      %1079 = vmatprep.subr.bf16.mxu0 %v952
      %1080 = vmatpush1.bf16.msra.mxu0 %v951
      %1081 = vmatprep.subr.bf16.mxu0 %v954
      %1082 = vmatpush1.bf16.msra.mxu0 %v953
      %1083 = vmatprep.subr.bf16.mxu0 %v956
      %1084 = vmatpush1.bf16.msra.mxu0 %v955
      %1085 = vmatprep.subr.bf16.mxu0 %v958
      %1086 = vmatpush1.bf16.msra.mxu0 %v957
      %1087 = vmatprep.subr.bf16.mxu0 %v960
      %1088 = vmatpush1.bf16.msra.mxu0 %v959
      %1089 = vmatprep.subr.bf16.mxu0 %v962
      %1090 = vmatpush1.bf16.msra.mxu0 %v961
      %1091 = vmatprep.subr.bf16.mxu0 %v964
      %1092 = vmatpush1.bf16.msra.mxu0 %v963
      %1093 = vmatprep.subr.bf16.mxu0 %v966
      %1094 = vmatpush1.bf16.msra.mxu0 %v965
      %1095 = vmatprep.subr.bf16.mxu0 %v968
      %1096 = vmatpush1.bf16.msra.mxu0 %v967
      %1097 = vmatprep.subr.bf16.mxu0 %v970
      %1098 = vmatpush1.bf16.msra.mxu0 %v969
      %1099 = vmatprep.subr.bf16.mxu0 %v972
      %1100 = vmatpush1.bf16.msra.mxu0 %v971
      %1101 = vmatprep.mubr.bf16.mxu0 %v670
      %1102 = vmatmul.mubr.bf16.gmra.mrb[0].mxu0 %v669
      %v1103 = vpop.f32.mrb[0].mxu0
      %v1104 = vadd.f32 %v742, %v1103
      %v1105 = vpop.f32.mrb[0].mxu0
      %v1106 = vadd.f32 %v746, %v1105
      %v1107 = vpop.f32.mrb[0].mxu0
      %v1108 = vpop.f32.mrb[0].mxu0
      %1109 = vdwg.mxu0
      %1110 = vmatprep.subr.bf16.mxu0 %v974
      %1111 = vmatpush1.bf16.msra.mxu0 %v973
      %1112 = vmatprep.subr.bf16.mxu0 %v976
      %1113 = vmatpush1.bf16.msra.mxu0 %v975
      %1114 = vmatprep.subr.bf16.mxu0 %v978
      %1115 = vmatpush1.bf16.msra.mxu0 %v977
      %1116 = vmatprep.subr.bf16.mxu0 %v980
      %1117 = vmatpush1.bf16.msra.mxu0 %v979
      %1118 = vmatprep.subr.bf16.mxu0 %v982
      %1119 = vmatpush1.bf16.msra.mxu0 %v981
      %1120 = vmatprep.subr.bf16.mxu0 %v984
      %1121 = vmatpush1.bf16.msra.mxu0 %v983
      %1122 = vmatprep.subr.bf16.mxu0 %v986
      %1123 = vmatpush1.bf16.msra.mxu0 %v985
      %1124 = vmatprep.subr.bf16.mxu0 %v988
      %1125 = vmatpush1.bf16.msra.mxu0 %v987
      %1126 = vmatprep.subr.bf16.mxu0 %v990
      %1127 = vmatpush1.bf16.msra.mxu0 %v989
      %1128 = vmatprep.subr.bf16.mxu0 %v992
      %1129 = vmatpush1.bf16.msra.mxu0 %v991
      %1130 = vmatprep.subr.bf16.mxu0 %v994
      %1131 = vmatpush1.bf16.msra.mxu0 %v993
      %1132 = vmatprep.subr.bf16.mxu0 %v996
      %1133 = vmatpush1.bf16.msra.mxu0 %v995
      %1134 = vmatprep.subr.bf16.mxu0 %v998
      %1135 = vmatpush1.bf16.msra.mxu0 %v997
      %1136 = vmatprep.subr.bf16.mxu0 %v1000
      %1137 = vmatpush1.bf16.msra.mxu0 %v999
      %1138 = vmatprep.subr.bf16.mxu0 %v1002
      %1139 = vmatpush1.bf16.msra.mxu0 %v1001
      %1140 = vmatprep.subr.bf16.mxu0 %v1004
      %1141 = vmatpush1.bf16.msra.mxu0 %v1003
      %1142 = vmatprep.mubr.bf16.mxu0 %v672
      %1143 = vmatmul.mubr.bf16.gmra.mrb[0].mxu0 %v671
      %v1144 = vpop.f32.mrb[0].mxu0
      %v1145 = vadd.f32 %v1104, %v1144
      %v1146 = vpop.f32.mrb[0].mxu0
      %v1147 = vadd.f32 %v1106, %v1146
      %v1148 = vpop.f32.mrb[0].mxu0
      %v1149 = vpop.f32.mrb[0].mxu0
      %1150 = vdwg.mxu0
      %v1151 = vmax.f32 %v1145, 0.0
      %v1152 = vmax.f32 %v1147, 0.0
      %v1153 = vpack.c.bf16 %v1151, %v1151
      %v1154 = vpack.c.bf16 %v1152, %v1152
      %v1155 = vld [vmem:[#allocation9] sm:$0xf]
      %v1156 = vld [vmem:[#allocation9 + $0x4] sm:$0xf]
      %v1157 = vld [vmem:[#allocation9 + $0x8] sm:$0xf]
      %v1158 = vld [vmem:[#allocation9 + $0xc] sm:$0xf]
      %v1159 = vld [vmem:[#allocation9 + $0x10] sm:$0xf]
      %v1160 = vld [vmem:[#allocation9 + $0x14] sm:$0xf]
      %v1161 = vld [vmem:[#allocation9 + $0x18] sm:$0xf]
      %v1162 = vld [vmem:[#allocation9 + $0x1c] sm:$0xf]
      %v1163 = vld [vmem:[#allocation9 + $0x20] sm:$0xf]
      %v1164 = vld [vmem:[#allocation9 + $0x24] sm:$0xf]
      %v1165 = vld [vmem:[#allocation9 + $0x28] sm:$0xf]
      %v1166 = vld [vmem:[#allocation9 + $0x2c] sm:$0xf]
      %v1167 = vld [vmem:[#allocation9 + $0x30] sm:$0xf]
      %v1168 = vld [vmem:[#allocation9 + $0x34] sm:$0xf]
      %v1169 = vld [vmem:[#allocation9 + $0x38] sm:$0xf]
      %v1170 = vld [vmem:[#allocation9 + $0x3c] sm:$0xf]
      %v1171 = vld [vmem:[#allocation9 + $0x40] sm:$0xf]
      %v1172 = vld [vmem:[#allocation9 + $0x44] sm:$0xf]
      %v1173 = vld [vmem:[#allocation9 + $0x48] sm:$0xf]
      %v1174 = vld [vmem:[#allocation9 + $0x4c] sm:$0xf]
      %v1175 = vld [vmem:[#allocation9 + $0x50] sm:$0xf]
      %v1176 = vld [vmem:[#allocation9 + $0x54] sm:$0xf]
      %v1177 = vld [vmem:[#allocation9 + $0x58] sm:$0xf]
      %v1178 = vld [vmem:[#allocation9 + $0x5c] sm:$0xf]
      %v1179 = vld [vmem:[#allocation9 + $0x60] sm:$0xf]
      %v1180 = vld [vmem:[#allocation9 + $0x64] sm:$0xf]
      %v1181 = vld [vmem:[#allocation9 + $0x68] sm:$0xf]
      %v1182 = vld [vmem:[#allocation9 + $0x6c] sm:$0xf]
      %v1183 = vld [vmem:[#allocation9 + $0x70] sm:$0xf]
      %v1184 = vld [vmem:[#allocation9 + $0x74] sm:$0xf]
      %v1185 = vld [vmem:[#allocation9 + $0x78] sm:$0xf]
      %v1186 = vld [vmem:[#allocation9 + $0x7c] sm:$0xf]
      %v1187 = vld [vmem:[%s6] sm:$0x1]
      %v1189 = vlaneseq
      %v1190 = vshrl.u32 %v1189, 7
      %v1191 = vsub.s32 0, %v1190
      %v1192 = vrot.slane %v1187, %v1191
      %v1226 = vunpack.c.l.b16 %v1155
      %v1227 = vunpack.c.l.b16 %v1156
      %v1228 = vunpack.c.l.b16 %v1157
      %v1229 = vunpack.c.l.b16 %v1158
      %v1230 = vunpack.c.l.b16 %v1159
      %v1231 = vunpack.c.l.b16 %v1160
      %v1232 = vunpack.c.l.b16 %v1161
      %v1233 = vunpack.c.l.b16 %v1162
      %v1234 = vunpack.c.l.b16 %v1163
      %v1235 = vunpack.c.l.b16 %v1164
      %v1236 = vunpack.c.l.b16 %v1165
      %v1237 = vunpack.c.l.b16 %v1166
      %v1238 = vunpack.c.l.b16 %v1167
      %v1239 = vunpack.c.l.b16 %v1168
      %v1240 = vunpack.c.l.b16 %v1169
      %v1241 = vunpack.c.l.b16 %v1170
      %v1242 = vunpack.c.l.b16 %v1171
      %v1243 = vunpack.c.l.b16 %v1172
      %v1244 = vunpack.c.l.b16 %v1173
      %v1245 = vunpack.c.l.b16 %v1174
      %v1246 = vunpack.c.l.b16 %v1175
      %v1247 = vunpack.c.l.b16 %v1176
      %v1248 = vunpack.c.l.b16 %v1177
      %v1249 = vunpack.c.l.b16 %v1178
      %v1250 = vunpack.c.l.b16 %v1179
      %v1251 = vunpack.c.l.b16 %v1180
      %v1252 = vunpack.c.l.b16 %v1181
      %v1253 = vunpack.c.l.b16 %v1182
      %v1254 = vunpack.c.l.b16 %v1183
      %v1255 = vunpack.c.l.b16 %v1184
      %v1256 = vunpack.c.l.b16 %v1185
      %v1257 = vunpack.c.l.b16 %v1186
      %v1258 = vpack.c.b16 %v1227, %v1226
      %v1259 = vpack.c.b16 %v1229, %v1228
      %v1260 = vpack.c.b16 %v1231, %v1230
      %v1261 = vpack.c.b16 %v1233, %v1232
      %v1262 = vpack.c.b16 %v1235, %v1234
      %v1263 = vpack.c.b16 %v1237, %v1236
      %v1264 = vpack.c.b16 %v1239, %v1238
      %v1265 = vpack.c.b16 %v1241, %v1240
      %v1266 = vpack.c.b16 %v1243, %v1242
      %v1267 = vpack.c.b16 %v1245, %v1244
      %v1268 = vpack.c.b16 %v1247, %v1246
      %v1269 = vpack.c.b16 %v1249, %v1248
      %v1270 = vpack.c.b16 %v1251, %v1250
      %v1271 = vpack.c.b16 %v1253, %v1252
      %v1272 = vpack.c.b16 %v1255, %v1254
      %v1273 = vpack.c.b16 %v1257, %v1256
      %1290 = vmatprep.subr.bf16.mxu0 0
      %1291 = vmatpush1.bf16.msra.mxu0 %v1258
      %1292 = vmatprep.subr.bf16.mxu0 0
      %1293 = vmatpush1.bf16.msra.mxu0 %v1259
      %1294 = vmatprep.subr.bf16.mxu0 0
      %1295 = vmatpush1.bf16.msra.mxu0 %v1260
      %1296 = vmatprep.subr.bf16.mxu0 0
      %1297 = vmatpush1.bf16.msra.mxu0 %v1261
      %1298 = vmatprep.subr.bf16.mxu0 0
      %1299 = vmatpush1.bf16.msra.mxu0 %v1262
      %1300 = vmatprep.subr.bf16.mxu0 0
      %1301 = vmatpush1.bf16.msra.mxu0 %v1263
      %1302 = vmatprep.subr.bf16.mxu0 0
      %1303 = vmatpush1.bf16.msra.mxu0 %v1264
      %1304 = vmatprep.subr.bf16.mxu0 0
      %1305 = vmatpush1.bf16.msra.mxu0 %v1265
      %1306 = vmatprep.subr.bf16.mxu0 0
      %1307 = vmatpush1.bf16.msra.mxu0 %v1266
      %1308 = vmatprep.subr.bf16.mxu0 0
      %1309 = vmatpush1.bf16.msra.mxu0 %v1267
      %1310 = vmatprep.subr.bf16.mxu0 0
      %1311 = vmatpush1.bf16.msra.mxu0 %v1268
      %1312 = vmatprep.subr.bf16.mxu0 0
      %1313 = vmatpush1.bf16.msra.mxu0 %v1269
      %1314 = vmatprep.subr.bf16.mxu0 0
      %1315 = vmatpush1.bf16.msra.mxu0 %v1270
      %1316 = vmatprep.subr.bf16.mxu0 0
      %1317 = vmatpush1.bf16.msra.mxu0 %v1271
      %1318 = vmatprep.subr.bf16.mxu0 0
      %1319 = vmatpush1.bf16.msra.mxu0 %v1272
      %1320 = vmatprep.subr.bf16.mxu0 0
      %1321 = vmatpush1.bf16.msra.mxu0 %v1273
      %1322 = vmatprep.mubr.bf16.mxu0 %v1154
      %1323 = vmatmul.mubr.bf16.gmra.mrb[0].mxu0 %v1153
      %v1324 = vpop.f32.mrb[0].mxu0
      %v1325 = vadd.f32 %v1192, %v1324
      %v1326 = vpop.f32.mrb[0].mxu0
      %v1327 = vpop.f32.mrb[0].mxu0
      %v1328 = vpop.f32.mrb[0].mxu0
      %1329 = vdwg.mxu0
      %vm1330 = vcmask 1041408
      %v1331 = vsel %vm1330, %v1325, 0.0
      %1332 = vadd.xlane.f32.xlu0 %v1331
      %v1333 = vpop.xlane.xlu0 %1332
      %v1334 = vrcp.pop 128.0
      %v1335 = vmul.f32 %v1333, %v1334
      %v1336 = vsub.f32 %v1325, %v1335
      %v1337 = vmul.f32 %v1336, %v1336
      %v1338 = vsel %vm1330, %v1337, 0.0
      %1339 = vadd.xlane.f32.xlu0 %v1338
      %v1340 = vpop.xlane.xlu0 %1339
      %v1341 = vmul.f32 %v1340, %v1334
      %v1342 = vadd.f32 %v1341, 1e-05
      %v1343 = vrsqrt.pop %v1342
      %v1344 = vmul.f32 %v1336, %v1343
      %v1345 = vld [vmem:[%s7] sm:$0x1]
      %v1347 = vlaneseq
      %v1348 = vshrl.u32 %v1347, 7
      %v1349 = vsub.s32 0, %v1348
      %v1350 = vrot.slane %v1345, %v1349
      %v1352 = vmul.f32 %v1344, %v1350
      %v1353 = vld [vmem:[%s8] sm:$0x1]
      %v1355 = vlaneseq
      %v1356 = vshrl.u32 %v1355, 7
      %v1357 = vsub.s32 0, %v1356
      %v1358 = vrot.slane %v1353, %v1357
      %v1360 = vadd.f32 %v1352, %v1358
      %1361 = vst [vmem:[#allocation11] sm:$0x3] %v1360
    $region61: #{tpu_custom_call.1} parent=1 // pred_fallthru
      _
    // Predicated region
    $region62: #{tpu_custom_call.1} parent=1 // pred_check
      _
    $region63: #{tpu_custom_call.1} parent=1 // pred_check_branch
      %1363 = sbr.rel (0) target = $region65
    $region64: #{tpu_custom_call.1} parent=1 // pred_region
      %s1365 = ssub.s32 32, 32
      %1366 = vsyncadd [#allocation5], %s1365
      %s1368 = sshll.u32 [#allocation11], 4
      %s1369 = int_to_ptr.vmem [resolvable:$true] %s1368
      %1371 = dma.vmem_to_hbm [thread:$0]  %s1369, 32, %s9, [#allocation5]
    $region65: #{tpu_custom_call.1} parent=1 // pred_fallthru
      _
    // Predicated region
    $region66: #{tpu_custom_call.1} parent=1 // pred_check
      _
    $region67: #{tpu_custom_call.1} parent=1 // pred_check_branch
      %1373 = sbr.rel (0) target = $region69
    $region68: #{tpu_custom_call.1} parent=1 // pred_region
      %1374 = dma.done [#allocation5], 32
    $region69: #{tpu_custom_call.1} parent=1 // pred_fallthru
      _
    %1375 = vsyncpa [#allocation4], 1
    %1376 = vsyncpa [#allocation7], 1
    %1377 = vsyncpa [#allocation10], 1
    %1378 = vsyncpa [#allocation5], 1

</llo_original>
